<compile_context>
chip_gen: v7x
topology: tpu7x:2x2x1
jax: 0.10.0
libtpu: 0.0.40
codegen_flags: <defaults>
</compile_context>

<pallas_src>
import jax
import jax.numpy as jnp
from jax.experimental import pallas as pl
from jax.experimental.pallas import tpu as pltpu

PAD = 128              # lane-dense hidden width (all hidden dims <= 128)
SUB_TILE = 128         # in-kernel batch sub-tile
MAX_BATCH_BLOCK = 1024 # per-grid-step batch block


def _round_up(x, m):
    return (x + m - 1) // m * m


def _cdiv(a, b):
    return -(-a // b)


# ----------------------------------- kernel ----------------------------------

def _mlp_disc_kernel(x_ref, w_ref, b_ref, o_ref):
    """Fused 5-layer MLP on one (block_b, d_in) activation tile.

    x_ref: (block_b, d_in) bf16  activations (unpadded feature dim)
    w_ref: (L, 128, 128)   bf16  packed, zero-padded weights, (in, out) layout
    b_ref: (8, 128)        f32   packed, zero-padded biases (row l = layer l)
    o_ref: (d_out, block_b) f32  lane-major output slab
    """
    block_b, d_in = x_ref.shape
    n_layers = w_ref.shape[0]
    d_out = o_ref.shape[0]

    # Sub-tile the batch so each chain's live activations stay small and the
    # scheduler has independent sub-tiles to overlap MXU / VPU / EUP work.
    sub = SUB_TILE if block_b % SUB_TILE == 0 else block_b
    n_sub = block_b // sub

    # Hoist the (1, 128) bias rows out of the sub-tile loop.
    bias = [b_ref[l:l + 1, :] for l in range(n_layers)]

    for s in range(n_sub):
        r0 = s * sub
        h = x_ref[r0:r0 + sub, :]                                 # (sub, d_in) bf16
        # Layer 0: K = d_in (weight slab sliced, no lane padding of x needed).
        z = jnp.dot(h, w_ref[0, :d_in, :],
                    preferred_element_type=jnp.float32) + bias[0]
        h = jnp.maximum(z, 0.0)
        # Hidden layers.
        for l in range(1, n_layers - 1):
            z = jnp.dot(h.astype(jnp.bfloat16), w_ref[l],
                        preferred_element_type=jnp.float32) + bias[l]
            h = jnp.maximum(z, 0.0)
        # Output layer + sigmoid, emitted lane-major via an XLU transpose.
        z = jnp.dot(h.astype(jnp.bfloat16), w_ref[n_layers - 1],
                    preferred_element_type=jnp.float32) + bias[n_layers - 1]
        y = jax.nn.sigmoid(jnp.transpose(z)[:d_out, :])           # (d_out, sub)
        o_ref[:, r0:r0 + sub] = y


# ----------------------------------- wrapper ----------------------------------

def pack_params(params):
    """params: list of (W, b) with W (in, out) f32, b (1, out) f32.

    Returns (w_slab, b_slab): (L, 128, 128) bf16 and (>=8, 128) f32,
    zero-padded so padded lanes stay exactly zero through every relu layer.
    """
    L = len(params)
    w_slab = jnp.zeros((L, PAD, PAD), jnp.float32)
    b_rows = max(8, _round_up(L, 8))
    b_slab = jnp.zeros((b_rows, PAD), jnp.float32)
    for i, (w, b) in enumerate(params):
        w_slab = w_slab.at[i, :w.shape[0], :w.shape[1]].set(w)
        b_slab = b_slab.at[i, :b.shape[-1]].set(b.reshape(-1))
    return w_slab.astype(jnp.bfloat16), b_slab


def discriminator_forward(x, w_slab, b_slab, d_out):
    """x: (B, D_in) f32. w_slab: (L,128,128) bf16. b_slab: (>=8,128) f32."""
    B, d_in = x.shape
    L = w_slab.shape[0]

    # Batch blocking: small batches -> one full-extent block; large batches ->
    # 128-aligned blocks with at least 2 grid steps (v7x: both TensorCores).
    B_pad = _round_up(B, 8)
    if B_pad <= 2 * SUB_TILE:
        block_b = B_pad
    else:
        n_blocks = max(2, _cdiv(B_pad, MAX_BATCH_BLOCK))
        block_b = _round_up(_cdiv(B_pad, n_blocks), SUB_TILE)
        B_pad = block_b * n_blocks
    grid = (B_pad // block_b,)

    # Cast to bf16 once (halves input HBM bytes; layer 0 needs bf16 anyway) and
    # pad only the batch dim if required — no 128-lane feature padding in HBM.
    x_bf = x.astype(jnp.bfloat16)
    if B_pad != B:
        x_in = jnp.zeros((B_pad, d_in), jnp.bfloat16).at[:B].set(x_bf)
    else:
        x_in = x_bf

    cost = pl.CostEstimate(
        flops=2 * B_pad * (d_in * PAD + (L - 1) * PAD * PAD),
        transcendentals=B_pad * d_out,
        bytes_accessed=(x_in.size * 2 + w_slab.size * 2
                        + b_slab.size * 4 + d_out * B_pad * 4),
    )

    out = pl.pallas_call(
        _mlp_disc_kernel,
        out_shape=jax.ShapeDtypeStruct((d_out, B_pad), jnp.float32),
        grid=grid,
        in_specs=[
            pl.BlockSpec((block_b, d_in), lambda i: (i, 0)),        # activations
            pl.BlockSpec(w_slab.shape, lambda i: (0, 0, 0)),        # weights (resident)
            pl.BlockSpec(b_slab.shape, lambda i: (0, 0)),           # biases  (resident)
        ],
        out_specs=pl.BlockSpec((d_out, block_b), lambda i: (0, i)), # lane-major output
        compiler_params=pltpu.CompilerParams(
            dimension_semantics=("parallel",)),
        cost_estimate=cost,
    )(x_in, w_slab, b_slab)

    return jnp.transpose(out[:, :B])                                # (B, d_out)


# ----------------------------- init & references -----------------------------

def _xavier_uniform(key, fan_in, fan_out):
    bound = jnp.sqrt(6.0 / (fan_in + fan_out))
    # Stored as (in, out): transpose of PyTorch's (out, in) weight layout.
    return jax.random.uniform(key, (fan_in, fan_out), jnp.float32,
                              minval=-bound, maxval=bound)


def _bias_init(key, fan_in, fan_out):
    bound = 1.0 / jnp.sqrt(jnp.asarray(fan_in, jnp.float32))
    return jax.random.uniform(key, (1, fan_out), jnp.float32,
                              minval=-bound, maxval=bound)


def make_params(key, dims):
    """dims = [D_in, w1, w2, w3, w4, D_out] -> list of (W, b)."""
    params = []
    for i in range(len(dims) - 1):
        key, kw, kb = jax.random.split(key, 3)
        params.append((_xavier_uniform(kw, dims[i], dims[i + 1]),
                       _bias_init(kb, dims[i], dims[i + 1])))
    return params


def reference_forward_packed(x, w_slab, b_slab, d_out):
    """Mirrors the kernel's numerics (bf16 operands, f32 accumulation)."""
    B, d_in = x.shape
    L = w_slab.shape[0]
    h = x.astype(jnp.bfloat16)
    z = jnp.dot(h, w_slab[0, :d_in, :],
                preferred_element_type=jnp.float32) + b_slab[0:1, :]
    h = jnp.maximum(z, 0.0)
    for l in range(1, L - 1):
        z = jnp.dot(h.astype(jnp.bfloat16), w_slab[l],
                    preferred_element_type=jnp.float32) + b_slab[l:l + 1, :]
        h = jnp.maximum(z, 0.0)
    z = jnp.dot(h.astype(jnp.bfloat16), w_slab[L - 1],
                preferred_element_type=jnp.float32) + b_slab[L - 1:L, :]
    return jax.nn.sigmoid(z[:, :d_out])


def reference_forward_f32(x, params):
    """Plain f32 reference of the original module's math."""
    h = x
    for (w, b) in params[:-1]:
        h = jax.nn.relu(h @ w + b)
    w, b = params[-1]
    return jax.nn.sigmoid(h @ w + b)


if __name__ == "__main__":
    # Small shapes consistent with the module: discriminator(D_in, D_out, w1..w4)
    B, D_in, w1, w2, w3, w4, D_out = 8, 32, 64, 48, 40, 24, 1
    key = jax.random.PRNGKey(0)
    k_x, k_x2, k_p = jax.random.split(key, 3)

    x = jax.random.normal(k_x, (B, D_in), jnp.float32)
    params = make_params(k_p, [D_in, w1, w2, w3, w4, D_out])
    w_slab, b_slab = pack_params(params)

    # Small batch (single block, no sub-tiling).
    y = discriminator_forward(x, w_slab, b_slab, D_out)
    y = jax.block_until_ready(y)
    assert y.shape == (B, D_out)

    y_ref = reference_forward_packed(x, w_slab, b_slab, D_out)
    assert jnp.allclose(y, y_ref, atol=1e-5, rtol=1e-5), (
        f"max abs diff vs packed ref {jnp.max(jnp.abs(y - y_ref))}")

    # Loose check against the full-f32 module semantics (bf16 rounding only).
    y_f32 = reference_forward_f32(x, params)
    assert jnp.allclose(y, y_f32, atol=5e-2), (
        f"max abs diff vs f32 ref {jnp.max(jnp.abs(y - y_f32))}")

    # Larger batch exercises the gridded (2-block) + sub-tiled path.
    B2 = 384
    x2 = jax.random.normal(k_x2, (B2, D_in), jnp.float32)
    y2 = jax.block_until_ready(discriminator_forward(x2, w_slab, b_slab, D_out))
    y2_ref = reference_forward_packed(x2, w_slab, b_slab, D_out)
    assert y2.shape == (B2, D_out)
    assert jnp.allclose(y2, y2_ref, atol=1e-5, rtol=1e-5), (
        f"max abs diff vs packed ref (B=384) {jnp.max(jnp.abs(y2 - y2_ref))}")

    print("KERNEL_OK")
</pallas_src>

<mosaic_0001>
module attributes {stable_mosaic.version = 11 : i64} {
  func.func @_mlp_disc_kernel(%arg0: i32, %arg1: memref<8x32xbf16, #tpu.memory_space<vmem>>, %arg2: memref<5x128x128xbf16, #tpu.memory_space<vmem>>, %arg3: memref<8x128xf32, #tpu.memory_space<vmem>>, %arg4: memref<1x8xf32, #tpu.memory_space<vmem>>) attributes {dimension_semantics = [#tpu.dimension_semantics<parallel>], iteration_bounds = array<i64: 1>, scalar_prefetch = 0 : i64, scratch_operands = 0 : i64, tpu.core_type = #tpu.core_type<tc>, window_params = [{transform_indices = @transform_0, window_bounds = array<i64: 8, 32>}, {pipeline_mode = #tpu.pipeline_mode<synchronous>, transform_indices = @transform_1, window_bounds = array<i64: 5, 128, 128>}, {pipeline_mode = #tpu.pipeline_mode<synchronous>, transform_indices = @transform_2, window_bounds = array<i64: 8, 128>}, {transform_indices = @transform_3, window_bounds = array<i64: 1, 8>}]} {
    %c0 = arith.constant 0 : index
    %c0_0 = arith.constant 0 : index
    %0 = vector.load %arg3[%c0, %c0_0] : memref<8x128xf32, #tpu.memory_space<vmem>>, vector<1x128xf32>
    %c1 = arith.constant 1 : index
    %c0_1 = arith.constant 0 : index
    %1 = vector.load %arg3[%c1, %c0_1] : memref<8x128xf32, #tpu.memory_space<vmem>>, vector<1x128xf32>
    %c2 = arith.constant 2 : index
    %c0_2 = arith.constant 0 : index
    %2 = vector.load %arg3[%c2, %c0_2] : memref<8x128xf32, #tpu.memory_space<vmem>>, vector<1x128xf32>
    %c3 = arith.constant 3 : index
    %c0_3 = arith.constant 0 : index
    %3 = vector.load %arg3[%c3, %c0_3] : memref<8x128xf32, #tpu.memory_space<vmem>>, vector<1x128xf32>
    %c4 = arith.constant 4 : index
    %c0_4 = arith.constant 0 : index
    %4 = vector.load %arg3[%c4, %c0_4] : memref<8x128xf32, #tpu.memory_space<vmem>>, vector<1x128xf32>
    %c0_5 = arith.constant 0 : index
    %c0_6 = arith.constant 0 : index
    %5 = vector.load %arg1[%c0_5, %c0_6] : memref<8x32xbf16, #tpu.memory_space<vmem>>, vector<8x32xbf16>
    %c0_7 = arith.constant 0 : index
    %c0_8 = arith.constant 0 : index
    %c0_9 = arith.constant 0 : index
    %6 = vector.load %arg2[%c0_7, %c0_8, %c0_9] : memref<5x128x128xbf16, #tpu.memory_space<vmem>>, vector<1x32x128xbf16>
    %7 = vector.shape_cast %6 : vector<1x32x128xbf16> to vector<32x128xbf16>
    %cst = arith.constant dense<0.000000e+00> : vector<8x128xf32>
    %8 = tpu.matmul %5, %7, %cst {dimension_numbers = #tpu.dot_dimension_numbers<[1], [0], [0], [1], [0, 0, 1, 1], [], []>} : vector<8x32xbf16>, vector<32x128xbf16>, vector<8x128xf32> -> vector<8x128xf32>
    %9 = vector.broadcast %0 : vector<1x128xf32> to vector<8x128xf32>
    %10 = arith.addf %8, %9 : vector<8x128xf32>
    %cst_10 = arith.constant 0.000000e+00 : f32
    %11 = vector.broadcast %cst_10 : f32 to vector<8x128xf32>
    %12 = arith.maximumf %10, %11 : vector<8x128xf32>
    %13 = arith.truncf %12 : vector<8x128xf32> to vector<8x128xbf16>
    %c1_11 = arith.constant 1 : index
    %c0_12 = arith.constant 0 : index
    %c0_13 = arith.constant 0 : index
    %14 = vector.load %arg2[%c1_11, %c0_12, %c0_13] : memref<5x128x128xbf16, #tpu.memory_space<vmem>>, vector<1x128x128xbf16>
    %15 = vector.shape_cast %14 : vector<1x128x128xbf16> to vector<128x128xbf16>
    %cst_14 = arith.constant dense<0.000000e+00> : vector<8x128xf32>
    %16 = tpu.matmul %13, %15, %cst_14 {dimension_numbers = #tpu.dot_dimension_numbers<[1], [0], [0], [1], [0, 0, 1, 1], [], []>} : vector<8x128xbf16>, vector<128x128xbf16>, vector<8x128xf32> -> vector<8x128xf32>
    %17 = vector.broadcast %1 : vector<1x128xf32> to vector<8x128xf32>
    %18 = arith.addf %16, %17 : vector<8x128xf32>
    %cst_15 = arith.constant 0.000000e+00 : f32
    %19 = vector.broadcast %cst_15 : f32 to vector<8x128xf32>
    %20 = arith.maximumf %18, %19 : vector<8x128xf32>
    %21 = arith.truncf %20 : vector<8x128xf32> to vector<8x128xbf16>
    %c2_16 = arith.constant 2 : index
    %c0_17 = arith.constant 0 : index
    %c0_18 = arith.constant 0 : index
    %22 = vector.load %arg2[%c2_16, %c0_17, %c0_18] : memref<5x128x128xbf16, #tpu.memory_space<vmem>>, vector<1x128x128xbf16>
    %23 = vector.shape_cast %22 : vector<1x128x128xbf16> to vector<128x128xbf16>
    %cst_19 = arith.constant dense<0.000000e+00> : vector<8x128xf32>
    %24 = tpu.matmul %21, %23, %cst_19 {dimension_numbers = #tpu.dot_dimension_numbers<[1], [0], [0], [1], [0, 0, 1, 1], [], []>} : vector<8x128xbf16>, vector<128x128xbf16>, vector<8x128xf32> -> vector<8x128xf32>
    %25 = vector.broadcast %2 : vector<1x128xf32> to vector<8x128xf32>
    %26 = arith.addf %24, %25 : vector<8x128xf32>
    %cst_20 = arith.constant 0.000000e+00 : f32
    %27 = vector.broadcast %cst_20 : f32 to vector<8x128xf32>
    %28 = arith.maximumf %26, %27 : vector<8x128xf32>
    %29 = arith.truncf %28 : vector<8x128xf32> to vector<8x128xbf16>
    %c3_21 = arith.constant 3 : index
    %c0_22 = arith.constant 0 : index
    %c0_23 = arith.constant 0 : index
    %30 = vector.load %arg2[%c3_21, %c0_22, %c0_23] : memref<5x128x128xbf16, #tpu.memory_space<vmem>>, vector<1x128x128xbf16>
    %31 = vector.shape_cast %30 : vector<1x128x128xbf16> to vector<128x128xbf16>
    %cst_24 = arith.constant dense<0.000000e+00> : vector<8x128xf32>
    %32 = tpu.matmul %29, %31, %cst_24 {dimension_numbers = #tpu.dot_dimension_numbers<[1], [0], [0], [1], [0, 0, 1, 1], [], []>} : vector<8x128xbf16>, vector<128x128xbf16>, vector<8x128xf32> -> vector<8x128xf32>
    %33 = vector.broadcast %3 : vector<1x128xf32> to vector<8x128xf32>
    %34 = arith.addf %32, %33 : vector<8x128xf32>
    %cst_25 = arith.constant 0.000000e+00 : f32
    %35 = vector.broadcast %cst_25 : f32 to vector<8x128xf32>
    %36 = arith.maximumf %34, %35 : vector<8x128xf32>
    %37 = arith.truncf %36 : vector<8x128xf32> to vector<8x128xbf16>
    %c4_26 = arith.constant 4 : index
    %c0_27 = arith.constant 0 : index
    %c0_28 = arith.constant 0 : index
    %38 = vector.load %arg2[%c4_26, %c0_27, %c0_28] : memref<5x128x128xbf16, #tpu.memory_space<vmem>>, vector<1x128x128xbf16>
    %39 = vector.shape_cast %38 : vector<1x128x128xbf16> to vector<128x128xbf16>
    %cst_29 = arith.constant dense<0.000000e+00> : vector<8x128xf32>
    %40 = tpu.matmul %37, %39, %cst_29 {dimension_numbers = #tpu.dot_dimension_numbers<[1], [0], [0], [1], [0, 0, 1, 1], [], []>} : vector<8x128xbf16>, vector<128x128xbf16>, vector<8x128xf32> -> vector<8x128xf32>
    %41 = vector.broadcast %4 : vector<1x128xf32> to vector<8x128xf32>
    %42 = arith.addf %40, %41 : vector<8x128xf32>
    %43 = tpu.transpose %42, [1, 0] : vector<8x128xf32> -> vector<128x8xf32>
    %44 = vector.extract_strided_slice %43 {offsets = [0, 0], sizes = [1, 8], strides = [1, 1]} : vector<128x8xf32> to vector<1x8xf32>
    %45 = arith.negf %44 : vector<1x8xf32>
    %46 = math.exp %45 : vector<1x8xf32>
    %cst_30 = arith.constant 1.000000e+00 : f32
    %47 = vector.broadcast %cst_30 : f32 to vector<1x8xf32>
    %48 = arith.addf %47, %46 : vector<1x8xf32>
    %49 = arith.divf %47, %48 : vector<1x8xf32>
    %c0_31 = arith.constant 0 : index
    %c0_32 = arith.constant 0 : index
    %50 = vector.load %arg4[%c0_31, %c0_32] : memref<1x8xf32, #tpu.memory_space<vmem>>, vector<1x8xf32>
    tpu.vector_store %arg4[%c0_31, %c0_32], %49 {strides = array<i32>} : memref<1x8xf32, #tpu.memory_space<vmem>>, vector<1x8xf32>,
    return
  }
  func.func @transform_0(%arg0: i32) -> (i32, i32) {
    %c0_i32 = arith.constant 0 : i32
    %c0_i32_0 = arith.constant 0 : i32
    return %arg0, %c0_i32 : i32, i32
  }
  func.func @transform_1(%arg0: i32) -> (i32, i32, i32) {
    %c0_i32 = arith.constant 0 : i32
    %c0_i32_0 = arith.constant 0 : i32
    %c0_i32_1 = arith.constant 0 : i32
    %c0_i32_2 = arith.constant 0 : i32
    return %c0_i32, %c0_i32_0, %c0_i32_1 : i32, i32, i32
  }
  func.func @transform_2(%arg0: i32) -> (i32, i32) {
    %c0_i32 = arith.constant 0 : i32
    %c0_i32_0 = arith.constant 0 : i32
    %c0_i32_1 = arith.constant 0 : i32
    return %c0_i32, %c0_i32_0 : i32, i32
  }
  func.func @transform_3(%arg0: i32) -> (i32, i32) {
    %c0_i32 = arith.constant 0 : i32
    %c0_i32_0 = arith.constant 0 : i32
    return %c0_i32, %arg0 : i32, i32
  }
}

</mosaic_0001>

<llo_original>
// kernel: tpu_custom_call.1
$region0: #{tpu_custom_call.1}
  #allocation0 [shape = 'u32[]', space=smem, size = 0x4, offset = 0x4, fixed_abs, tag = 'smem constant byte address 0x4 - core index']
  #allocation1 [shape = 'u32[144,128]{1,0:T(1,128)}', space=vmem, size = 0x12000, scoped, tag = 'internal scratch']
  %s0 = inlined_call_operand.hbm [shape: bf16[8,32], index: 0, kind: input, shape index: {}]
  %s1 = inlined_call_operand.hbm [shape: bf16[5,128,128], index: 1, kind: input, shape index: {}]
  %s2 = inlined_call_operand.hbm [shape: f32[8,128], index: 2, kind: input, shape index: {}]
  %s3 = inlined_call_operand.hbm [shape: f32[1,8], index: 3, kind: output, shape index: {}]
  %s4 = sld [smem:[#allocation0]]
  $region34: #{tpu_custom_call.1} parent=0
    _
  %s6 = ssub.s32 1, %s4
  %s7 = scalar_select 0, %s6, %s4
  $region1: #{tpu_custom_call.1} parent=0
    #allocation2 [shape = 'u8[2048]{0}', space=vmem, size = 0x800, scoped, tag = 'input window, operand 0, single buffered']
    #allocation3 [shape = 's32[1]{0}', space=sflag, size = 0x4, scoped, tag = 'scoped memory for tpu_custom_call.1']
    #allocation4 [shape = 's32[1]{0}', space=sflag, size = 0x4, scoped, tag = 'scoped memory for tpu_custom_call.1']
    #allocation5 [shape = 'u8[163840]{0}', space=vmem, size = 0x28000, scoped, tag = 'input window, operand 1, single buffered']
    #allocation6 [shape = 's32[1]{0}', space=sflag, size = 0x4, scoped, tag = 'scoped memory for tpu_custom_call.1']
    #allocation7 [shape = 'u8[4096]{0}', space=vmem, size = 0x1000, scoped, tag = 'input window, operand 2, single buffered']
    #allocation8 [shape = 'u8[512]{0}', space=vmem, size = 0x400, scoped, tag = 'output window, operand 0, single buffered']
    %8 = vsyncpa [#allocation3], 0
    %9 = vsyncpa [#allocation6], 0
    %10 = vsyncpa [#allocation4], 0
    // Predicated region
    $region2: #{tpu_custom_call.1} parent=1 // pred_check
      _
    $region3: #{tpu_custom_call.1} parent=1 // pred_check_branch
      %12 = sbr.rel (0) target = $region5
    $region4: #{tpu_custom_call.1} parent=1 // pred_region
      %s14 = ssub.s32 64, 64
      %15 = vsyncadd [#allocation3], %s14
      %s17 = sshll.u32 [#allocation2], 4
      %s18 = int_to_ptr.vmem [resolvable:$true] %s17
      %20 = dma.hbm_to_vmem [thread:$0]  %s0, 64, %s18, [#allocation3]
    $region5: #{tpu_custom_call.1} parent=1 // pred_fallthru
      _
    // Predicated region
    $region6: #{tpu_custom_call.1} parent=1 // pred_check
      _
    $region7: #{tpu_custom_call.1} parent=1 // pred_check_branch
      %22 = sbr.rel (0) target = $region9
    $region8: #{tpu_custom_call.1} parent=1 // pred_region
      %s24 = ssub.s32 5120, 5120
      %25 = vsyncadd [#allocation6], %s24
      %s26 = sshll.u32 [#allocation5], 4
      %s27 = int_to_ptr.vmem [resolvable:$true] %s26
      %32 = dma.hbm_to_vmem [thread:$0]  %s1, 5120, %s27, [#allocation6], 64, 64, 4
    $region9: #{tpu_custom_call.1} parent=1 // pred_fallthru
      _
    // Predicated region
    $region10: #{tpu_custom_call.1} parent=1 // pred_check
      _
    $region11: #{tpu_custom_call.1} parent=1 // pred_check_branch
      %34 = sbr.rel (0) target = $region13
    $region12: #{tpu_custom_call.1} parent=1 // pred_region
      %s36 = ssub.s32 128, 128
      %37 = vsyncadd [#allocation6], %s36
      %s39 = sshll.u32 [#allocation7], 4
      %s40 = int_to_ptr.vmem [resolvable:$true] %s39
      %42 = dma.hbm_to_vmem [thread:$0]  %s2, 128, %s40, [#allocation6]
    $region13: #{tpu_custom_call.1} parent=1 // pred_fallthru
      _
    // Predicated region
    $region14: #{tpu_custom_call.1} parent=1 // pred_check
      _
    $region15: #{tpu_custom_call.1} parent=1 // pred_check_branch
      %44 = sbr.rel (0) target = $region17
    $region16: #{tpu_custom_call.1} parent=1 // pred_region
      %45 = dma.done [#allocation3], 64
    $region17: #{tpu_custom_call.1} parent=1 // pred_fallthru
      _
    // Predicated region
    $region18: #{tpu_custom_call.1} parent=1 // pred_check
      _
    $region19: #{tpu_custom_call.1} parent=1 // pred_check_branch
      %47 = sbr.rel (0) target = $region21
    $region20: #{tpu_custom_call.1} parent=1 // pred_region
      %48 = dma.done [#allocation6], 5120
    $region21: #{tpu_custom_call.1} parent=1 // pred_fallthru
      _
    // Predicated region
    $region22: #{tpu_custom_call.1} parent=1 // pred_check
      _
    $region23: #{tpu_custom_call.1} parent=1 // pred_check_branch
      %50 = sbr.rel (0) target = $region25
    $region24: #{tpu_custom_call.1} parent=1 // pred_region
      %51 = dma.done [#allocation6], 128
    $region25: #{tpu_custom_call.1} parent=1 // pred_fallthru
      _
    %v53 = vld [vmem:[#allocation7] sm:$0x1]
    %v54 = vld [vmem:[#allocation7 + $0x1] sm:$0x1]
    %v55 = vld [vmem:[#allocation7 + $0x2] sm:$0x1]
    %v56 = vld [vmem:[#allocation7 + $0x3] sm:$0x1]
    %v57 = vld [vmem:[#allocation7 + $0x4] sm:$0x1]
    %v58 = vld [vmem:[#allocation2] sm:$0xf]
    %v59 = vld [vmem:[#allocation5] sm:$0xf]
    %v60 = vld [vmem:[#allocation5 + $0x4] sm:$0xf]
    %v61 = vld [vmem:[#allocation5 + $0x8] sm:$0xf]
    %v62 = vld [vmem:[#allocation5 + $0xc] sm:$0xf]
    %v63 = vlaneseq
    %v64 = vshrl.u32 %v63, 7
    %v65 = vsub.s32 0, %v64
    %v66 = vrot.slane %v53, %v65
    %v71 = vunpack.c.l.b16 %v59
    %v72 = vunpack.c.l.b16 %v60
    %v73 = vunpack.c.l.b16 %v61
    %v74 = vunpack.c.l.b16 %v62
    %v75 = vpack.c.b16 %v72, %v71
    %v76 = vpack.c.b16 %v74, %v73
    %vm79 = vcmask 261120
    %v81 = vsel %vm79, %v58, 0
    %83 = vmatprep.subr.bf16.mxu0 0
    %84 = vmatpush1.bf16.msra.mxu0 %v75
    %85 = vmatprep.subr.bf16.mxu0 0
    %86 = vmatpush1.bf16.msra.mxu0 %v76
    %87 = vmatprep.subr.bf16.mxu0 0
    %88 = vmatpush1.bf16.msra.mxu0 0
    %89 = vmatprep.subr.bf16.mxu0 0
    %90 = vmatpush1.bf16.msra.mxu0 0
    %91 = vmatprep.subr.bf16.mxu0 0
    %92 = vmatpush1.bf16.msra.mxu0 0
    %93 = vmatprep.subr.bf16.mxu0 0
    %94 = vmatpush1.bf16.msra.mxu0 0
    %95 = vmatprep.subr.bf16.mxu0 0
    %96 = vmatpush1.bf16.msra.mxu0 0
    %97 = vmatprep.subr.bf16.mxu0 0
    %98 = vmatpush1.bf16.msra.mxu0 0
    %99 = vmatprep.subr.bf16.mxu0 0
    %100 = vmatpush1.bf16.msra.mxu0 0
    %101 = vmatprep.subr.bf16.mxu0 0
    %102 = vmatpush1.bf16.msra.mxu0 0
    %103 = vmatprep.subr.bf16.mxu0 0
    %104 = vmatpush1.bf16.msra.mxu0 0
    %105 = vmatprep.subr.bf16.mxu0 0
    %106 = vmatpush1.bf16.msra.mxu0 0
    %107 = vmatprep.subr.bf16.mxu0 0
    %108 = vmatpush1.bf16.msra.mxu0 0
    %109 = vmatprep.subr.bf16.mxu0 0
    %110 = vmatpush1.bf16.msra.mxu0 0
    %111 = vmatprep.subr.bf16.mxu0 0
    %112 = vmatpush1.bf16.msra.mxu0 0
    %113 = vmatprep.subr.bf16.mxu0 0
    %114 = vmatpush1.bf16.msra.mxu0 0
    %115 = vmatprep.mubr.bf16.mxu0 0
    %116 = vmatmul.mubr.bf16.gmra.mrb[0].mxu0 %v81
    %v117 = vpop.f32.mrb[0].mxu0
    %v118 = vadd.f32 %v66, %v117
    %v119 = vpop.f32.mrb[0].mxu0
    %v120 = vpop.f32.mrb[0].mxu0
    %v121 = vpop.f32.mrb[0].mxu0
    %122 = vdwg.mxu0
    %v123 = vmax.f32 %v118, 0.0
    %v124 = vpack.c.bf16 %v123, %v123
    %s125 = scalar_lea.vmem [#allocation5], 64
    %v126 = vld [vmem:[%s125] sm:$0xf]
    %v127 = vld [vmem:[%s125 + $0x4] sm:$0xf]
    %v128 = vld [vmem:[%s125 + $0x8] sm:$0xf]
    %v129 = vld [vmem:[%s125 + $0xc] sm:$0xf]
    %v130 = vld [vmem:[%s125 + $0x10] sm:$0xf]
    %v131 = vld [vmem:[%s125 + $0x14] sm:$0xf]
    %v132 = vld [vmem:[%s125 + $0x18] sm:$0xf]
    %v133 = vld [vmem:[%s125 + $0x1c] sm:$0xf]
    %v134 = vld [vmem:[%s125 + $0x20] sm:$0xf]
    %v135 = vld [vmem:[%s125 + $0x24] sm:$0xf]
    %v136 = vld [vmem:[%s125 + $0x28] sm:$0xf]
    %v137 = vld [vmem:[%s125 + $0x2c] sm:$0xf]
    %v138 = vld [vmem:[%s125 + $0x30] sm:$0xf]
    %v139 = vld [vmem:[%s125 + $0x34] sm:$0xf]
    %v140 = vld [vmem:[%s125 + $0x38] sm:$0xf]
    %v141 = vld [vmem:[%s125 + $0x3c] sm:$0xf]
    %v142 = vlaneseq
    %v143 = vshrl.u32 %v142, 7
    %v144 = vsub.s32 0, %v143
    %v145 = vrot.slane %v54, %v144
    %v162 = vunpack.c.l.b16 %v126
    %v163 = vunpack.c.l.b16 %v127
    %v164 = vunpack.c.l.b16 %v128
    %v165 = vunpack.c.l.b16 %v129
    %v166 = vunpack.c.l.b16 %v130
    %v167 = vunpack.c.l.b16 %v131
    %v168 = vunpack.c.l.b16 %v132
    %v169 = vunpack.c.l.b16 %v133
    %v170 = vunpack.c.l.b16 %v134
    %v171 = vunpack.c.l.b16 %v135
    %v172 = vunpack.c.l.b16 %v136
    %v173 = vunpack.c.l.b16 %v137
    %v174 = vunpack.c.l.b16 %v138
    %v175 = vunpack.c.l.b16 %v139
    %v176 = vunpack.c.l.b16 %v140
    %v177 = vunpack.c.l.b16 %v141
    %v178 = vpack.c.b16 %v163, %v162
    %v179 = vpack.c.b16 %v165, %v164
    %v180 = vpack.c.b16 %v167, %v166
    %v181 = vpack.c.b16 %v169, %v168
    %v182 = vpack.c.b16 %v171, %v170
    %v183 = vpack.c.b16 %v173, %v172
    %v184 = vpack.c.b16 %v175, %v174
    %v185 = vpack.c.b16 %v177, %v176
    %194 = vmatprep.subr.bf16.mxu0 0
    %195 = vmatpush1.bf16.msra.mxu0 %v178
    %196 = vmatprep.subr.bf16.mxu0 0
    %197 = vmatpush1.bf16.msra.mxu0 %v179
    %198 = vmatprep.subr.bf16.mxu0 0
    %199 = vmatpush1.bf16.msra.mxu0 %v180
    %200 = vmatprep.subr.bf16.mxu0 0
    %201 = vmatpush1.bf16.msra.mxu0 %v181
    %202 = vmatprep.subr.bf16.mxu0 0
    %203 = vmatpush1.bf16.msra.mxu0 %v182
    %204 = vmatprep.subr.bf16.mxu0 0
    %205 = vmatpush1.bf16.msra.mxu0 %v183
    %206 = vmatprep.subr.bf16.mxu0 0
    %207 = vmatpush1.bf16.msra.mxu0 %v184
    %208 = vmatprep.subr.bf16.mxu0 0
    %209 = vmatpush1.bf16.msra.mxu0 %v185
    %210 = vmatprep.subr.bf16.mxu0 0
    %211 = vmatpush1.bf16.msra.mxu0 0
    %212 = vmatprep.subr.bf16.mxu0 0
    %213 = vmatpush1.bf16.msra.mxu0 0
    %214 = vmatprep.subr.bf16.mxu0 0
    %215 = vmatpush1.bf16.msra.mxu0 0
    %216 = vmatprep.subr.bf16.mxu0 0
    %217 = vmatpush1.bf16.msra.mxu0 0
    %218 = vmatprep.subr.bf16.mxu0 0
    %219 = vmatpush1.bf16.msra.mxu0 0
    %220 = vmatprep.subr.bf16.mxu0 0
    %221 = vmatpush1.bf16.msra.mxu0 0
    %222 = vmatprep.subr.bf16.mxu0 0
    %223 = vmatpush1.bf16.msra.mxu0 0
    %224 = vmatprep.subr.bf16.mxu0 0
    %225 = vmatpush1.bf16.msra.mxu0 0
    %226 = vmatprep.mubr.bf16.mxu0 0
    %227 = vmatmul.mubr.bf16.gmra.mrb[0].mxu0 %v124
    %v228 = vpop.f32.mrb[0].mxu0
    %v229 = vadd.f32 %v145, %v228
    %v230 = vpop.f32.mrb[0].mxu0
    %v231 = vpop.f32.mrb[0].mxu0
    %v232 = vpop.f32.mrb[0].mxu0
    %233 = vdwg.mxu0
    %v234 = vmax.f32 %v229, 0.0
    %v235 = vpack.c.bf16 %v234, %v234
    %s236 = scalar_lea.vmem [#allocation5], 128
    %v237 = vld [vmem:[%s236] sm:$0xf]
    %v238 = vld [vmem:[%s236 + $0x4] sm:$0xf]
    %v239 = vld [vmem:[%s236 + $0x8] sm:$0xf]
    %v240 = vld [vmem:[%s236 + $0xc] sm:$0xf]
    %v241 = vld [vmem:[%s236 + $0x10] sm:$0xf]
    %v242 = vld [vmem:[%s236 + $0x14] sm:$0xf]
    %v243 = vld [vmem:[%s236 + $0x18] sm:$0xf]
    %v244 = vld [vmem:[%s236 + $0x1c] sm:$0xf]
    %v245 = vld [vmem:[%s236 + $0x20] sm:$0xf]
    %v246 = vld [vmem:[%s236 + $0x24] sm:$0xf]
    %v247 = vld [vmem:[%s236 + $0x28] sm:$0xf]
    %v248 = vld [vmem:[%s236 + $0x2c] sm:$0xf]
    %v249 = vld [vmem:[%s236 + $0x30] sm:$0xf]
    %v250 = vld [vmem:[%s236 + $0x34] sm:$0xf]
    %v251 = vld [vmem:[%s236 + $0x38] sm:$0xf]
    %v252 = vld [vmem:[%s236 + $0x3c] sm:$0xf]
    %v253 = vlaneseq
    %v254 = vshrl.u32 %v253, 7
    %v255 = vsub.s32 0, %v254
    %v256 = vrot.slane %v55, %v255
    %v273 = vunpack.c.l.b16 %v237
    %v274 = vunpack.c.l.b16 %v238
    %v275 = vunpack.c.l.b16 %v239
    %v276 = vunpack.c.l.b16 %v240
    %v277 = vunpack.c.l.b16 %v241
    %v278 = vunpack.c.l.b16 %v242
    %v279 = vunpack.c.l.b16 %v243
    %v280 = vunpack.c.l.b16 %v244
    %v281 = vunpack.c.l.b16 %v245
    %v282 = vunpack.c.l.b16 %v246
    %v283 = vunpack.c.l.b16 %v247
    %v284 = vunpack.c.l.b16 %v248
    %v285 = vunpack.c.l.b16 %v249
    %v286 = vunpack.c.l.b16 %v250
    %v287 = vunpack.c.l.b16 %v251
    %v288 = vunpack.c.l.b16 %v252
    %v289 = vpack.c.b16 %v274, %v273
    %v290 = vpack.c.b16 %v276, %v275
    %v291 = vpack.c.b16 %v278, %v277
    %v292 = vpack.c.b16 %v280, %v279
    %v293 = vpack.c.b16 %v282, %v281
    %v294 = vpack.c.b16 %v284, %v283
    %v295 = vpack.c.b16 %v286, %v285
    %v296 = vpack.c.b16 %v288, %v287
    %305 = vmatprep.subr.bf16.mxu0 0
    %306 = vmatpush1.bf16.msra.mxu0 %v289
    %307 = vmatprep.subr.bf16.mxu0 0
    %308 = vmatpush1.bf16.msra.mxu0 %v290
    %309 = vmatprep.subr.bf16.mxu0 0
    %310 = vmatpush1.bf16.msra.mxu0 %v291
    %311 = vmatprep.subr.bf16.mxu0 0
    %312 = vmatpush1.bf16.msra.mxu0 %v292
    %313 = vmatprep.subr.bf16.mxu0 0
    %314 = vmatpush1.bf16.msra.mxu0 %v293
    %315 = vmatprep.subr.bf16.mxu0 0
    %316 = vmatpush1.bf16.msra.mxu0 %v294
    %317 = vmatprep.subr.bf16.mxu0 0
    %318 = vmatpush1.bf16.msra.mxu0 %v295
    %319 = vmatprep.subr.bf16.mxu0 0
    %320 = vmatpush1.bf16.msra.mxu0 %v296
    %321 = vmatprep.subr.bf16.mxu0 0
    %322 = vmatpush1.bf16.msra.mxu0 0
    %323 = vmatprep.subr.bf16.mxu0 0
    %324 = vmatpush1.bf16.msra.mxu0 0
    %325 = vmatprep.subr.bf16.mxu0 0
    %326 = vmatpush1.bf16.msra.mxu0 0
    %327 = vmatprep.subr.bf16.mxu0 0
    %328 = vmatpush1.bf16.msra.mxu0 0
    %329 = vmatprep.subr.bf16.mxu0 0
    %330 = vmatpush1.bf16.msra.mxu0 0
    %331 = vmatprep.subr.bf16.mxu0 0
    %332 = vmatpush1.bf16.msra.mxu0 0
    %333 = vmatprep.subr.bf16.mxu0 0
    %334 = vmatpush1.bf16.msra.mxu0 0
    %335 = vmatprep.subr.bf16.mxu0 0
    %336 = vmatpush1.bf16.msra.mxu0 0
    %337 = vmatprep.mubr.bf16.mxu0 0
    %338 = vmatmul.mubr.bf16.gmra.mrb[0].mxu0 %v235
    %v339 = vpop.f32.mrb[0].mxu0
    %v340 = vadd.f32 %v256, %v339
    %v341 = vpop.f32.mrb[0].mxu0
    %v342 = vpop.f32.mrb[0].mxu0
    %v343 = vpop.f32.mrb[0].mxu0
    %344 = vdwg.mxu0
    %v345 = vmax.f32 %v340, 0.0
    %v346 = vpack.c.bf16 %v345, %v345
    %s347 = scalar_lea.vmem [#allocation5], 192
    %v348 = vld [vmem:[%s347] sm:$0xf]
    %v349 = vld [vmem:[%s347 + $0x4] sm:$0xf]
    %v350 = vld [vmem:[%s347 + $0x8] sm:$0xf]
    %v351 = vld [vmem:[%s347 + $0xc] sm:$0xf]
    %v352 = vld [vmem:[%s347 + $0x10] sm:$0xf]
    %v353 = vld [vmem:[%s347 + $0x14] sm:$0xf]
    %v354 = vld [vmem:[%s347 + $0x18] sm:$0xf]
    %v355 = vld [vmem:[%s347 + $0x1c] sm:$0xf]
    %v356 = vld [vmem:[%s347 + $0x20] sm:$0xf]
    %v357 = vld [vmem:[%s347 + $0x24] sm:$0xf]
    %v358 = vld [vmem:[%s347 + $0x28] sm:$0xf]
    %v359 = vld [vmem:[%s347 + $0x2c] sm:$0xf]
    %v360 = vld [vmem:[%s347 + $0x30] sm:$0xf]
    %v361 = vld [vmem:[%s347 + $0x34] sm:$0xf]
    %v362 = vld [vmem:[%s347 + $0x38] sm:$0xf]
    %v363 = vld [vmem:[%s347 + $0x3c] sm:$0xf]
    %v364 = vlaneseq
    %v365 = vshrl.u32 %v364, 7
    %v366 = vsub.s32 0, %v365
    %v367 = vrot.slane %v56, %v366
    %v384 = vunpack.c.l.b16 %v348
    %v385 = vunpack.c.l.b16 %v349
    %v386 = vunpack.c.l.b16 %v350
    %v387 = vunpack.c.l.b16 %v351
    %v388 = vunpack.c.l.b16 %v352
    %v389 = vunpack.c.l.b16 %v353
    %v390 = vunpack.c.l.b16 %v354
    %v391 = vunpack.c.l.b16 %v355
    %v392 = vunpack.c.l.b16 %v356
    %v393 = vunpack.c.l.b16 %v357
    %v394 = vunpack.c.l.b16 %v358
    %v395 = vunpack.c.l.b16 %v359
    %v396 = vunpack.c.l.b16 %v360
    %v397 = vunpack.c.l.b16 %v361
    %v398 = vunpack.c.l.b16 %v362
    %v399 = vunpack.c.l.b16 %v363
    %v400 = vpack.c.b16 %v385, %v384
    %v401 = vpack.c.b16 %v387, %v386
    %v402 = vpack.c.b16 %v389, %v388
    %v403 = vpack.c.b16 %v391, %v390
    %v404 = vpack.c.b16 %v393, %v392
    %v405 = vpack.c.b16 %v395, %v394
    %v406 = vpack.c.b16 %v397, %v396
    %v407 = vpack.c.b16 %v399, %v398
    %416 = vmatprep.subr.bf16.mxu0 0
    %417 = vmatpush1.bf16.msra.mxu0 %v400
    %418 = vmatprep.subr.bf16.mxu0 0
    %419 = vmatpush1.bf16.msra.mxu0 %v401
    %420 = vmatprep.subr.bf16.mxu0 0
    %421 = vmatpush1.bf16.msra.mxu0 %v402
    %422 = vmatprep.subr.bf16.mxu0 0
    %423 = vmatpush1.bf16.msra.mxu0 %v403
    %424 = vmatprep.subr.bf16.mxu0 0
    %425 = vmatpush1.bf16.msra.mxu0 %v404
    %426 = vmatprep.subr.bf16.mxu0 0
    %427 = vmatpush1.bf16.msra.mxu0 %v405
    %428 = vmatprep.subr.bf16.mxu0 0
    %429 = vmatpush1.bf16.msra.mxu0 %v406
    %430 = vmatprep.subr.bf16.mxu0 0
    %431 = vmatpush1.bf16.msra.mxu0 %v407
    %432 = vmatprep.subr.bf16.mxu0 0
    %433 = vmatpush1.bf16.msra.mxu0 0
    %434 = vmatprep.subr.bf16.mxu0 0
    %435 = vmatpush1.bf16.msra.mxu0 0
    %436 = vmatprep.subr.bf16.mxu0 0
    %437 = vmatpush1.bf16.msra.mxu0 0
    %438 = vmatprep.subr.bf16.mxu0 0
    %439 = vmatpush1.bf16.msra.mxu0 0
    %440 = vmatprep.subr.bf16.mxu0 0
    %441 = vmatpush1.bf16.msra.mxu0 0
    %442 = vmatprep.subr.bf16.mxu0 0
    %443 = vmatpush1.bf16.msra.mxu0 0
    %444 = vmatprep.subr.bf16.mxu0 0
    %445 = vmatpush1.bf16.msra.mxu0 0
    %446 = vmatprep.subr.bf16.mxu0 0
    %447 = vmatpush1.bf16.msra.mxu0 0
    %448 = vmatprep.mubr.bf16.mxu0 0
    %449 = vmatmul.mubr.bf16.gmra.mrb[0].mxu0 %v346
    %v450 = vpop.f32.mrb[0].mxu0
    %v451 = vadd.f32 %v367, %v450
    %v452 = vpop.f32.mrb[0].mxu0
    %v453 = vpop.f32.mrb[0].mxu0
    %v454 = vpop.f32.mrb[0].mxu0
    %455 = vdwg.mxu0
    %v456 = vmax.f32 %v451, 0.0
    %v457 = vpack.c.bf16 %v456, %v456
    %s458 = scalar_lea.vmem [#allocation5], 256
    %v459 = vld [vmem:[%s458] sm:$0xf]
    %v460 = vld [vmem:[%s458 + $0x4] sm:$0xf]
    %v461 = vld [vmem:[%s458 + $0x8] sm:$0xf]
    %v462 = vld [vmem:[%s458 + $0xc] sm:$0xf]
    %v463 = vld [vmem:[%s458 + $0x10] sm:$0xf]
    %v464 = vld [vmem:[%s458 + $0x14] sm:$0xf]
    %v465 = vld [vmem:[%s458 + $0x18] sm:$0xf]
    %v466 = vld [vmem:[%s458 + $0x1c] sm:$0xf]
    %v467 = vld [vmem:[%s458 + $0x20] sm:$0xf]
    %v468 = vld [vmem:[%s458 + $0x24] sm:$0xf]
    %v469 = vld [vmem:[%s458 + $0x28] sm:$0xf]
    %v470 = vld [vmem:[%s458 + $0x2c] sm:$0xf]
    %v471 = vld [vmem:[%s458 + $0x30] sm:$0xf]
    %v472 = vld [vmem:[%s458 + $0x34] sm:$0xf]
    %v473 = vld [vmem:[%s458 + $0x38] sm:$0xf]
    %v474 = vld [vmem:[%s458 + $0x3c] sm:$0xf]
    %v475 = vlaneseq
    %v476 = vshrl.u32 %v475, 7
    %v477 = vsub.s32 0, %v476
    %v478 = vrot.slane %v57, %v477
    %v495 = vunpack.c.l.b16 %v459
    %v496 = vunpack.c.l.b16 %v460
    %v497 = vunpack.c.l.b16 %v461
    %v498 = vunpack.c.l.b16 %v462
    %v499 = vunpack.c.l.b16 %v463
    %v500 = vunpack.c.l.b16 %v464
    %v501 = vunpack.c.l.b16 %v465
    %v502 = vunpack.c.l.b16 %v466
    %v503 = vunpack.c.l.b16 %v467
    %v504 = vunpack.c.l.b16 %v468
    %v505 = vunpack.c.l.b16 %v469
    %v506 = vunpack.c.l.b16 %v470
    %v507 = vunpack.c.l.b16 %v471
    %v508 = vunpack.c.l.b16 %v472
    %v509 = vunpack.c.l.b16 %v473
    %v510 = vunpack.c.l.b16 %v474
    %v511 = vpack.c.b16 %v496, %v495
    %v512 = vpack.c.b16 %v498, %v497
    %v513 = vpack.c.b16 %v500, %v499
    %v514 = vpack.c.b16 %v502, %v501
    %v515 = vpack.c.b16 %v504, %v503
    %v516 = vpack.c.b16 %v506, %v505
    %v517 = vpack.c.b16 %v508, %v507
    %v518 = vpack.c.b16 %v510, %v509
    %527 = vmatprep.subr.bf16.mxu0 0
    %528 = vmatpush1.bf16.msra.mxu0 %v511
    %529 = vmatprep.subr.bf16.mxu0 0
    %530 = vmatpush1.bf16.msra.mxu0 %v512
    %531 = vmatprep.subr.bf16.mxu0 0
    %532 = vmatpush1.bf16.msra.mxu0 %v513
    %533 = vmatprep.subr.bf16.mxu0 0
    %534 = vmatpush1.bf16.msra.mxu0 %v514
    %535 = vmatprep.subr.bf16.mxu0 0
    %536 = vmatpush1.bf16.msra.mxu0 %v515
    %537 = vmatprep.subr.bf16.mxu0 0
    %538 = vmatpush1.bf16.msra.mxu0 %v516
    %539 = vmatprep.subr.bf16.mxu0 0
    %540 = vmatpush1.bf16.msra.mxu0 %v517
    %541 = vmatprep.subr.bf16.mxu0 0
    %542 = vmatpush1.bf16.msra.mxu0 %v518
    %543 = vmatprep.subr.bf16.mxu0 0
    %544 = vmatpush1.bf16.msra.mxu0 0
    %545 = vmatprep.subr.bf16.mxu0 0
    %546 = vmatpush1.bf16.msra.mxu0 0
    %547 = vmatprep.subr.bf16.mxu0 0
    %548 = vmatpush1.bf16.msra.mxu0 0
    %549 = vmatprep.subr.bf16.mxu0 0
    %550 = vmatpush1.bf16.msra.mxu0 0
    %551 = vmatprep.subr.bf16.mxu0 0
    %552 = vmatpush1.bf16.msra.mxu0 0
    %553 = vmatprep.subr.bf16.mxu0 0
    %554 = vmatpush1.bf16.msra.mxu0 0
    %555 = vmatprep.subr.bf16.mxu0 0
    %556 = vmatpush1.bf16.msra.mxu0 0
    %557 = vmatprep.subr.bf16.mxu0 0
    %558 = vmatpush1.bf16.msra.mxu0 0
    %559 = vmatprep.mubr.bf16.mxu0 0
    %560 = vmatmul.mubr.bf16.gmra.mrb[0].mxu0 %v457
    %v561 = vpop.f32.mrb[0].mxu0
    %v562 = vadd.f32 %v478, %v561
    %v563 = vpop.f32.mrb[0].mxu0
    %v564 = vpop.f32.mrb[0].mxu0
    %v565 = vpop.f32.mrb[0].mxu0
    %566 = vdwg.mxu0
    %567 = vxpose.xlu0.b32.start [1/16] %v562, 128
    %568 = vxpose.xlu0.b32.cont [2/16] 0.0, 128
    %569 = vxpose.xlu0.b32.cont [3/16] 0.0, 128
    %570 = vxpose.xlu0.b32.cont [4/16] 0.0, 128
    %571 = vxpose.xlu0.b32.cont [5/16] 0.0, 128
    %572 = vxpose.xlu0.b32.cont [6/16] 0.0, 128
    %573 = vxpose.xlu0.b32.cont [7/16] 0.0, 128
    %574 = vxpose.xlu0.b32.cont [8/16] 0.0, 128
    %575 = vxpose.xlu0.b32.cont [9/16] 0.0, 128
    %576 = vxpose.xlu0.b32.cont [10/16] 0.0, 128
    %577 = vxpose.xlu0.b32.cont [11/16] 0.0, 128
    %578 = vxpose.xlu0.b32.cont [12/16] 0.0, 128
    %579 = vxpose.xlu0.b32.cont [13/16] 0.0, 128
    %580 = vxpose.xlu0.b32.cont [14/16] 0.0, 128
    %581 = vxpose.xlu0.b32.cont [15/16] 0.0, 128
    %582 = vxpose.xlu0.b32.end [16/16] 0.0, 128
    %v583 = vpop.trf.xlu0
    %v584 = vpop.trf.xlu0
    %v585 = vpop.trf.xlu0
    %v586 = vpop.trf.xlu0
    %v587 = vpop.trf.xlu0
    %v588 = vpop.trf.xlu0
    %v589 = vpop.trf.xlu0
    %v590 = vpop.trf.xlu0
    %v591 = vpop.trf.xlu0
    %v592 = vpop.trf.xlu0
    %v593 = vpop.trf.xlu0
    %v594 = vpop.trf.xlu0
    %v595 = vpop.trf.xlu0
    %v596 = vpop.trf.xlu0
    %v597 = vpop.trf.xlu0
    %v598 = vpop.trf.xlu0
    %v599 = vxor.u32 %v583, 2147483648
    %v600 = vmul.f32 %v599, 1.442695
    %v601 = vpow.pop %v600
    %v602 = vadd.f32 %v601, 1.0
    %v603 = vrcp.pop %v602
    %v604 = vmul.f32 1.0, %v603
    %vm605 = vcmask 57344
    %606 = vst.msk [vmem:[#allocation8] sm:$0x1] %vm605, %v604
    // Predicated region
    $region26: #{tpu_custom_call.1} parent=1 // pred_check
      _
    $region27: #{tpu_custom_call.1} parent=1 // pred_check_branch
      %608 = sbr.rel (0) target = $region29
    $region28: #{tpu_custom_call.1} parent=1 // pred_region
      %s610 = ssub.s32 16, 16
      %611 = vsyncadd [#allocation4], %s610
      %s613 = sshll.u32 [#allocation8], 4
      %s614 = int_to_ptr.vmem [resolvable:$true] %s613
      %616 = dma.vmem_to_hbm [thread:$0]  %s614, 16, %s3, [#allocation4]
    $region29: #{tpu_custom_call.1} parent=1 // pred_fallthru
      _
    // Predicated region
    $region30: #{tpu_custom_call.1} parent=1 // pred_check
      _
    $region31: #{tpu_custom_call.1} parent=1 // pred_check_branch
      %618 = sbr.rel (0) target = $region33
    $region32: #{tpu_custom_call.1} parent=1 // pred_region
      %619 = dma.done [#allocation4], 16
    $region33: #{tpu_custom_call.1} parent=1 // pred_fallthru
      _
    %620 = vsyncpa [#allocation3], 1
    %621 = vsyncpa [#allocation6], 1
    %622 = vsyncpa [#allocation4], 1

</llo_original>
